<compile_context>
chip_gen: v5e
topology: v5e:2x2
jax: 0.10.0
libtpu: 0.0.40
codegen_flags: <defaults>
</compile_context>

<pallas_src>
import jax
import jax.numpy as jnp
from jax.experimental import pallas as pl
from jax.experimental.pallas import tpu as pltpu

_LANE = 128


def _round_up(n, m):
    return (n + m - 1) // m * m


# ----------------------------------------------------------------------------
# Kernel: fused Linear -> ReLU -> (Dropout=identity) -> Linear on one batch tile
# ----------------------------------------------------------------------------
def _mlp_kernel(x_ref, w1_ref, b1_ref, w2_ref, b2_ref, o_ref):
    x = x_ref[...]                                                # (TB, D_in)
    if x.dtype != w1_ref.dtype:                                   # bf16 weights: keep MXU on
        x = x.astype(w1_ref.dtype)                                # the single-pass bf16 path
    h = jnp.dot(x, w1_ref[...], preferred_element_type=jnp.float32)
    h = h + b1_ref[...]                                           # (1, H_pad) broadcast, f32
    h = jnp.maximum(h, 0.0)                                       # ReLU, f32 on VPU
    # Dropout: identity (eval mode).
    if h.dtype != w2_ref.dtype:                                   # only cast when bf16 weights
        h = h.astype(w2_ref.dtype)
    y = jnp.dot(h, w2_ref[...], preferred_element_type=jnp.float32)
    y = y + b2_ref[...]                                           # (1, O_pad) broadcast, f32
    o_ref[...] = y.astype(o_ref.dtype)                            # lane-dense store


# ----------------------------------------------------------------------------
# One-time parameter preparation (NOT on the forward hot path)
# ----------------------------------------------------------------------------
def prepare_params(w1, b1, w2, b2, *, param_dtype=jnp.float32):
    """Convert torch.nn.Linear-layout params once at init time.

    w1: (fc_units, input_size), b1: (fc_units,)
    w2: (output_size, fc_units), b2: (output_size,)

    Returns (in, out)-layout weights with BOTH the hidden dim and the final
    output dim zero-padded to multiples of 128 lanes. Optionally store weights
    in bf16 for v6e/v7x MXU peak (keep f32 for strict-f32 numerics)."""
    fc_units, _ = w1.shape
    out_size = w2.shape[0]
    h_pad = _round_up(fc_units, _LANE)
    out_pad = _round_up(out_size, _LANE)

    w1_t = jnp.asarray(w1, param_dtype).T                         # (d_in, H)
    w1_t = jnp.pad(w1_t, ((0, 0), (0, h_pad - fc_units)))         # lane-pad H with zeros
    b1_r = jnp.pad(jnp.asarray(b1, jnp.float32),
                   (0, h_pad - fc_units)).reshape(1, h_pad)       # biases stay f32

    w2_t = jnp.asarray(w2, param_dtype).T                         # (H, O)
    w2_t = jnp.pad(w2_t, ((0, h_pad - fc_units),
                          (0, out_pad - out_size)))               # zero rows/cols: inert
    b2_r = jnp.pad(jnp.asarray(b2, jnp.float32),
                   (0, out_pad - out_size)).reshape(1, out_pad)
    return w1_t, b1_r, w2_t, b2_r, out_size


def _choose_batch_tile(B, block_b):
    """Biggest useful batch tile; >=2 grid steps whenever B > 8 (v7x 2-TC)."""
    if B <= 8:
        return B                                                  # full-dim block
    half = _round_up(pl.cdiv(B, 2), 8)                            # split across 2 TCs
    return min(block_b, half)


# ----------------------------------------------------------------------------
# Forward
# ----------------------------------------------------------------------------
def fully_connected_forward(x, w1_t, b1_r, w2_t, b2_r, out_size, *,
                            block_b=2048, return_padded=False):
    """x: (B, input_size). Params come from prepare_params (already transposed /
    lane-padded). Returns (B, out_size), or the lane-padded (B, out_pad) result
    when return_padded=True (lets a downstream consumer fuse the column slice
    and skip one HBM pass)."""
    B, d_in = x.shape
    h_pad = w1_t.shape[1]
    out_pad = w2_t.shape[1]

    tb = _choose_batch_tile(B, block_b)
    grid = (pl.cdiv(B, tb),)                                      # trailing block masked by Pallas

    # VMEM budget: double-buffered x/y tiles + in-kernel h & f32 y-acc for the
    # current tile + resident weights (default double-buffered) + headroom.
    # Capped at 48 MiB so the tiling is safe on v7x (64 MiB physical per TC).
    itm_x = jnp.dtype(x.dtype).itemsize
    itm_w = jnp.dtype(w1_t.dtype).itemsize
    tile_bytes = 2 * tb * (d_in * itm_x + out_pad * itm_x)
    interm_bytes = tb * h_pad * 4 + tb * out_pad * 4
    weight_bytes = 2 * ((w1_t.size + w2_t.size) * itm_w + (b1_r.size + b2_r.size) * 4)
    vmem_limit = min(48 << 20,
                     int(1.5 * (tile_bytes + interm_bytes + weight_bytes)) + (1 << 20))

    y = pl.pallas_call(
        _mlp_kernel,
        out_shape=jax.ShapeDtypeStruct((B, out_pad), x.dtype),
        grid=grid,
        in_specs=[
            pl.BlockSpec((tb, d_in), lambda i: (i, 0)),           # streamed per batch tile
            pl.BlockSpec((d_in, h_pad), lambda i: (0, 0)),        # resident across grid
            pl.BlockSpec((1, h_pad), lambda i: (0, 0)),
            pl.BlockSpec((h_pad, out_pad), lambda i: (0, 0)),
            pl.BlockSpec((1, out_pad), lambda i: (0, 0)),
        ],
        out_specs=pl.BlockSpec((tb, out_pad), lambda i: (i, 0)),
        compiler_params=pltpu.CompilerParams(
            dimension_semantics=("parallel",),                    # 2-TC sharding on v7x
            vmem_limit_bytes=vmem_limit),
    )(x, w1_t, b1_r, w2_t, b2_r)

    if return_padded:
        return y                                                  # (B, out_pad), cols >= out_size are 0
    return y[:, :out_size]


def _reference(x, w1, b1, w2, b2):
    h = jnp.maximum(x @ w1.T + b1, 0.0)
    return h @ w2.T + b2


if __name__ == "__main__":
    # Shapes implied by the module: input_size=32, fc_units=64, output_size=16
    B, input_size, fc_units, output_size = 8, 32, 64, 16
    rho = 0.5  # dropout prob (inference mode -> identity)

    key = jax.random.PRNGKey(0)
    kx, kw1, kb1, kw2, kb2 = jax.random.split(key, 5)

    x = jax.random.normal(kx, (B, input_size), dtype=jnp.float32)
    # Deterministic param init (uniform, torch.nn.Linear-like bounds), torch layout.
    bound1 = 1.0 / (input_size ** 0.5)
    w1 = jax.random.uniform(kw1, (fc_units, input_size), jnp.float32, -bound1, bound1)
    b1 = jax.random.uniform(kb1, (fc_units,), jnp.float32, -bound1, bound1)
    bound2 = 1.0 / (fc_units ** 0.5)
    w2 = jax.random.uniform(kw2, (output_size, fc_units), jnp.float32, -bound2, bound2)
    b2 = jax.random.uniform(kb2, (output_size,), jnp.float32, -bound2, bound2)

    # One-time param prep (init time) — no transposes / padding on the hot path.
    w1_t, b1_r, w2_t, b2_r, osize = prepare_params(w1, b1, w2, b2,
                                                   param_dtype=jnp.float32)

    y = fully_connected_forward(x, w1_t, b1_r, w2_t, b2_r, osize)
    y = jax.block_until_ready(y)

    y_ref = _reference(x, w1, b1, w2, b2)
    assert y.shape == (B, output_size)
    assert jnp.allclose(y, y_ref, atol=1e-5, rtol=1e-5), "mismatch vs reference"

    # Also exercise a ragged batch (B % tb != 0) to verify the masked trailing
    # block (no wrapper-side pad) is handled correctly.
    B2 = 13
    x2 = jax.random.normal(jax.random.PRNGKey(1), (B2, input_size), jnp.float32)
    y2 = jax.block_until_ready(
        fully_connected_forward(x2, w1_t, b1_r, w2_t, b2_r, osize, block_b=8))
    assert y2.shape == (B2, output_size)
    assert jnp.allclose(y2, _reference(x2, w1, b1, w2, b2), atol=1e-5, rtol=1e-5)

    print("KERNEL_OK")
</pallas_src>

<mosaic_0001>
module attributes {stable_mosaic.version = 11 : i64} {
  func.func @_mlp_kernel(%arg0: i32, %arg1: memref<8x32xf32, #tpu.memory_space<vmem>>, %arg2: memref<32x128xf32, #tpu.memory_space<vmem>>, %arg3: memref<1x128xf32, #tpu.memory_space<vmem>>, %arg4: memref<128x128xf32, #tpu.memory_space<vmem>>, %arg5: memref<1x128xf32, #tpu.memory_space<vmem>>, %arg6: memref<8x128xf32, #tpu.memory_space<vmem>>) attributes {dimension_semantics = [#tpu.dimension_semantics<parallel>], iteration_bounds = array<i64: 1>, scalar_prefetch = 0 : i64, scratch_operands = 0 : i64, tpu.core_type = #tpu.core_type<tc>, window_params = [{transform_indices = @transform_0, window_bounds = array<i64: 8, 32>}, {pipeline_mode = #tpu.pipeline_mode<synchronous>, transform_indices = @transform_1, window_bounds = array<i64: 32, 128>}, {pipeline_mode = #tpu.pipeline_mode<synchronous>, transform_indices = @transform_2, window_bounds = array<i64: 1, 128>}, {pipeline_mode = #tpu.pipeline_mode<synchronous>, transform_indices = @transform_3, window_bounds = array<i64: 128, 128>}, {pipeline_mode = #tpu.pipeline_mode<synchronous>, transform_indices = @transform_4, window_bounds = array<i64: 1, 128>}, {transform_indices = @transform_5, window_bounds = array<i64: 8, 128>}]} {
    %c0 = arith.constant 0 : index
    %c0_0 = arith.constant 0 : index
    %0 = vector.load %arg1[%c0, %c0_0] : memref<8x32xf32, #tpu.memory_space<vmem>>, vector<8x32xf32>
    %c0_1 = arith.constant 0 : index
    %c0_2 = arith.constant 0 : index
    %1 = vector.load %arg2[%c0_1, %c0_2] : memref<32x128xf32, #tpu.memory_space<vmem>>, vector<32x128xf32>
    %cst = arith.constant dense<0.000000e+00> : vector<8x128xf32>
    %2 = tpu.matmul %0, %1, %cst {dimension_numbers = #tpu.dot_dimension_numbers<[1], [0], [0], [1], [0, 0, 1, 1], [], []>} : vector<8x32xf32>, vector<32x128xf32>, vector<8x128xf32> -> vector<8x128xf32>
    %c0_3 = arith.constant 0 : index
    %c0_4 = arith.constant 0 : index
    %3 = vector.load %arg3[%c0_3, %c0_4] : memref<1x128xf32, #tpu.memory_space<vmem>>, vector<1x128xf32>
    %4 = vector.broadcast %3 : vector<1x128xf32> to vector<8x128xf32>
    %5 = arith.addf %2, %4 : vector<8x128xf32>
    %cst_5 = arith.constant 0.000000e+00 : f32
    %6 = vector.broadcast %cst_5 : f32 to vector<8x128xf32>
    %7 = arith.maximumf %5, %6 : vector<8x128xf32>
    %c0_6 = arith.constant 0 : index
    %c0_7 = arith.constant 0 : index
    %8 = vector.load %arg4[%c0_6, %c0_7] : memref<128x128xf32, #tpu.memory_space<vmem>>, vector<128x128xf32>
    %cst_8 = arith.constant dense<0.000000e+00> : vector<8x128xf32>
    %9 = tpu.matmul %7, %8, %cst_8 {dimension_numbers = #tpu.dot_dimension_numbers<[1], [0], [0], [1], [0, 0, 1, 1], [], []>} : vector<8x128xf32>, vector<128x128xf32>, vector<8x128xf32> -> vector<8x128xf32>
    %c0_9 = arith.constant 0 : index
    %c0_10 = arith.constant 0 : index
    %10 = vector.load %arg5[%c0_9, %c0_10] : memref<1x128xf32, #tpu.memory_space<vmem>>, vector<1x128xf32>
    %11 = vector.broadcast %10 : vector<1x128xf32> to vector<8x128xf32>
    %12 = arith.addf %9, %11 : vector<8x128xf32>
    %c0_11 = arith.constant 0 : index
    %c0_12 = arith.constant 0 : index
    %13 = vector.load %arg6[%c0_11, %c0_12] : memref<8x128xf32, #tpu.memory_space<vmem>>, vector<8x128xf32>
    tpu.vector_store %arg6[%c0_11, %c0_12], %12 {strides = array<i32>} : memref<8x128xf32, #tpu.memory_space<vmem>>, vector<8x128xf32>,
    return
  }
  func.func @transform_0(%arg0: i32) -> (i32, i32) {
    %c0_i32 = arith.constant 0 : i32
    %c0_i32_0 = arith.constant 0 : i32
    return %arg0, %c0_i32 : i32, i32
  }
  func.func @transform_1(%arg0: i32) -> (i32, i32) {
    %c0_i32 = arith.constant 0 : i32
    %c0_i32_0 = arith.constant 0 : i32
    %c0_i32_1 = arith.constant 0 : i32
    return %c0_i32, %c0_i32_0 : i32, i32
  }
  func.func @transform_2(%arg0: i32) -> (i32, i32) {
    %c0_i32 = arith.constant 0 : i32
    %c0_i32_0 = arith.constant 0 : i32
    %c0_i32_1 = arith.constant 0 : i32
    return %c0_i32, %c0_i32_0 : i32, i32
  }
  func.func @transform_3(%arg0: i32) -> (i32, i32) {
    %c0_i32 = arith.constant 0 : i32
    %c0_i32_0 = arith.constant 0 : i32
    %c0_i32_1 = arith.constant 0 : i32
    return %c0_i32, %c0_i32_0 : i32, i32
  }
  func.func @transform_4(%arg0: i32) -> (i32, i32) {
    %c0_i32 = arith.constant 0 : i32
    %c0_i32_0 = arith.constant 0 : i32
    %c0_i32_1 = arith.constant 0 : i32
    return %c0_i32, %c0_i32_0 : i32, i32
  }
  func.func @transform_5(%arg0: i32) -> (i32, i32) {
    %c0_i32 = arith.constant 0 : i32
    %c0_i32_0 = arith.constant 0 : i32
    return %arg0, %c0_i32 : i32, i32
  }
}

</mosaic_0001>

<llo_original>
// kernel: tpu_custom_call.1
$region0: #{tpu_custom_call.1}
  #allocation0 [shape = 'u32[]', space=smem, size = 0x4, offset = 0x4, fixed_abs, tag = 'smem constant byte address 0x4 - core index']
  #allocation1 [shape = 'u32[72,128]{1,0:T(1,128)}', space=vmem, size = 0x9000, scoped, tag = 'internal scratch']
  %s0 = inlined_call_operand.hbm [shape: f32[8,32], index: 0, kind: input, shape index: {}]
  %s1 = inlined_call_operand.hbm [shape: f32[32,128], index: 1, kind: input, shape index: {}]
  %s2 = inlined_call_operand.vmem [shape: f32[1,128], index: 2, kind: input, shape index: {}]
  %s3 = inlined_call_operand.hbm [shape: f32[128,128], index: 3, kind: input, shape index: {}]
  %s4 = inlined_call_operand.vmem [shape: f32[1,128], index: 4, kind: input, shape index: {}]
  %s5 = inlined_call_operand.hbm [shape: f32[8,128], index: 5, kind: output, shape index: {}]
  %s6 = sld [smem:[#allocation0]]
  $region42: #{tpu_custom_call.1} parent=0
    _
  %s8 = ssub.s32 1, %s6
  %s9 = scalar_select 0, %s8, %s6
  $region1: #{tpu_custom_call.1} parent=0
    #allocation2 [shape = 'u8[4096]{0}', space=vmem, size = 0x1000, scoped, tag = 'input window, operand 0, single buffered']
    #allocation3 [shape = 's32[1]{0}', space=sflag, size = 0x4, scoped, tag = 'scoped memory for tpu_custom_call.1']
    #allocation4 [shape = 's32[1]{0}', space=sflag, size = 0x4, scoped, tag = 'scoped memory for tpu_custom_call.1']
    #allocation5 [shape = 'u8[16384]{0}', space=vmem, size = 0x4000, scoped, tag = 'input window, operand 1, single buffered']
    #allocation6 [shape = 's32[1]{0}', space=sflag, size = 0x4, scoped, tag = 'scoped memory for tpu_custom_call.1']
    #allocation7 [shape = 'u8[65536]{0}', space=vmem, size = 0x10000, scoped, tag = 'input window, operand 3, single buffered']
    #allocation8 [shape = 'u8[4096]{0}', space=vmem, size = 0x1000, scoped, tag = 'output window, operand 0, single buffered']
    %10 = vsyncpa [#allocation3], 0
    %11 = vsyncpa [#allocation6], 0
    %12 = vsyncpa [#allocation4], 0
    // Predicated region
    $region2: #{tpu_custom_call.1} parent=1 // pred_check
      _
    $region3: #{tpu_custom_call.1} parent=1 // pred_check_branch
      %14 = sbr.rel (0) target = $region5
    $region4: #{tpu_custom_call.1} parent=1 // pred_region
      %16 = vsyncadd [#allocation3], 0
      %s18 = sshll.u32 %s0, 4
      %s19 = int_to_ptr.hbm [resolvable:$true] %s18
      %s20 = sshll.u32 [#allocation2], 4
      %s21 = int_to_ptr.vmem [resolvable:$true] %s20
      %23 = dma.hbm_to_vmem [thread:$0]  %s19, 128, %s21, [#allocation3]
    $region5: #{tpu_custom_call.1} parent=1 // pred_fallthru
      _
    // Predicated region
    $region6: #{tpu_custom_call.1} parent=1 // pred_check
      _
    $region7: #{tpu_custom_call.1} parent=1 // pred_check_branch
      %25 = sbr.rel (0) target = $region9
    $region8: #{tpu_custom_call.1} parent=1 // pred_region
      %27 = vsyncadd [#allocation6], 0
      %s28 = sshll.u32 %s1, 4
      %s29 = int_to_ptr.hbm [resolvable:$true] %s28
      %s30 = sshll.u32 [#allocation5], 4
      %s31 = int_to_ptr.vmem [resolvable:$true] %s30
      %36 = dma.hbm_to_vmem [thread:$0]  %s29, 512, %s31, [#allocation6], 128, 128, 8
    $region9: #{tpu_custom_call.1} parent=1 // pred_fallthru
      _
    // Predicated region
    $region10: #{tpu_custom_call.1} parent=1 // pred_check
      _
    $region11: #{tpu_custom_call.1} parent=1 // pred_check_branch
      %38 = sbr.rel (0) target = $region13
    $region12: #{tpu_custom_call.1} parent=1 // pred_region
      _
    $region13: #{tpu_custom_call.1} parent=1 // pred_fallthru
      _
    // Predicated region
    $region14: #{tpu_custom_call.1} parent=1 // pred_check
      _
    $region15: #{tpu_custom_call.1} parent=1 // pred_check_branch
      %40 = sbr.rel (0) target = $region17
    $region16: #{tpu_custom_call.1} parent=1 // pred_region
      %42 = vsyncadd [#allocation6], 0
      %s43 = sshll.u32 %s3, 4
      %s44 = int_to_ptr.hbm [resolvable:$true] %s43
      %s45 = sshll.u32 [#allocation7], 4
      %s46 = int_to_ptr.vmem [resolvable:$true] %s45
      %51 = dma.hbm_to_vmem [thread:$0]  %s44, 2048, %s46, [#allocation6], 128, 128, 8
    $region17: #{tpu_custom_call.1} parent=1 // pred_fallthru
      _
    // Predicated region
    $region18: #{tpu_custom_call.1} parent=1 // pred_check
      _
    $region19: #{tpu_custom_call.1} parent=1 // pred_check_branch
      %53 = sbr.rel (0) target = $region21
    $region20: #{tpu_custom_call.1} parent=1 // pred_region
      _
    $region21: #{tpu_custom_call.1} parent=1 // pred_fallthru
      _
    // Predicated region
    $region22: #{tpu_custom_call.1} parent=1 // pred_check
      _
    $region23: #{tpu_custom_call.1} parent=1 // pred_check_branch
      %55 = sbr.rel (0) target = $region25
    $region24: #{tpu_custom_call.1} parent=1 // pred_region
      %57 = dma.done [#allocation3], 128
    $region25: #{tpu_custom_call.1} parent=1 // pred_fallthru
      _
    // Predicated region
    $region26: #{tpu_custom_call.1} parent=1 // pred_check
      _
    $region27: #{tpu_custom_call.1} parent=1 // pred_check_branch
      %59 = sbr.rel (0) target = $region29
    $region28: #{tpu_custom_call.1} parent=1 // pred_region
      %61 = dma.done [#allocation6], 512
    $region29: #{tpu_custom_call.1} parent=1 // pred_fallthru
      _
    // Predicated region
    $region30: #{tpu_custom_call.1} parent=1 // pred_check
      _
    $region31: #{tpu_custom_call.1} parent=1 // pred_check_branch
      %63 = sbr.rel (0) target = $region33
    $region32: #{tpu_custom_call.1} parent=1 // pred_region
      %65 = dma.done [#allocation6], 2048
    $region33: #{tpu_custom_call.1} parent=1 // pred_fallthru
      _
    %v66 = vld [vmem:[#allocation2] sm:$0xff]
    %v67 = vld [vmem:[#allocation5] sm:$0xff]
    %v68 = vld [vmem:[#allocation5 + $0x8] sm:$0xff]
    %v69 = vld [vmem:[#allocation5 + $0x10] sm:$0xff]
    %v70 = vld [vmem:[#allocation5 + $0x18] sm:$0xff]
    %v71 = vld [vmem:[%s2] sm:$0x1]
    %v73 = vperm.slane %v71, 0
    %vm75 = vcmask 261120
    %v77 = vsel %vm75, %v66, 0
    %79 = vmatpush.msra.mxu0 0.0
    %80 = vmatpush.msra.mxu0 0.0
    %81 = vmatpush.msra.mxu0 0.0
    %82 = vmatpush.msra.mxu0 0.0
    %83 = vmatpush.msra.mxu0 0.0
    %84 = vmatpush.msra.mxu0 0.0
    %85 = vmatpush.msra.mxu0 0.0
    %86 = vmatpush.msra.mxu0 0.0
    %87 = vmatpush.msra.mxu0 0.0
    %88 = vmatpush.msra.mxu0 0.0
    %89 = vmatpush.msra.mxu0 0.0
    %90 = vmatpush.msra.mxu0 0.0
    %91 = vmatpush.msra.mxu0 %v70
    %92 = vmatpush.msra.mxu0 %v69
    %93 = vmatpush.msra.mxu0 %v68
    %94 = vmatpush.msra.mxu0 %v67
    %95 = vmatmul.f32.gmra.mxu0 %v77
    %v96 = vpop.f32.mrf.mxu0
    %v97 = vadd.f32 %v73, %v96
    %98 = vdwg.mxu0
    %v99 = vmax.f32 %v97, 0.0
    %v100 = vld [vmem:[#allocation7] sm:$0xff]
    %v101 = vld [vmem:[#allocation7 + $0x8] sm:$0xff]
    %v102 = vld [vmem:[#allocation7 + $0x10] sm:$0xff]
    %v103 = vld [vmem:[#allocation7 + $0x18] sm:$0xff]
    %v104 = vld [vmem:[#allocation7 + $0x20] sm:$0xff]
    %v105 = vld [vmem:[#allocation7 + $0x28] sm:$0xff]
    %v106 = vld [vmem:[#allocation7 + $0x30] sm:$0xff]
    %v107 = vld [vmem:[#allocation7 + $0x38] sm:$0xff]
    %v108 = vld [vmem:[#allocation7 + $0x40] sm:$0xff]
    %v109 = vld [vmem:[#allocation7 + $0x48] sm:$0xff]
    %v110 = vld [vmem:[#allocation7 + $0x50] sm:$0xff]
    %v111 = vld [vmem:[#allocation7 + $0x58] sm:$0xff]
    %v112 = vld [vmem:[#allocation7 + $0x60] sm:$0xff]
    %v113 = vld [vmem:[#allocation7 + $0x68] sm:$0xff]
    %v114 = vld [vmem:[#allocation7 + $0x70] sm:$0xff]
    %v115 = vld [vmem:[#allocation7 + $0x78] sm:$0xff]
    %v116 = vld [vmem:[%s4] sm:$0x1]
    %v118 = vperm.slane %v116, 0
    %120 = vmatpush.msra.mxu0 %v115
    %121 = vmatpush.msra.mxu0 %v114
    %122 = vmatpush.msra.mxu0 %v113
    %123 = vmatpush.msra.mxu0 %v112
    %124 = vmatpush.msra.mxu0 %v111
    %125 = vmatpush.msra.mxu0 %v110
    %126 = vmatpush.msra.mxu0 %v109
    %127 = vmatpush.msra.mxu0 %v108
    %128 = vmatpush.msra.mxu0 %v107
    %129 = vmatpush.msra.mxu0 %v106
    %130 = vmatpush.msra.mxu0 %v105
    %131 = vmatpush.msra.mxu0 %v104
    %132 = vmatpush.msra.mxu0 %v103
    %133 = vmatpush.msra.mxu0 %v102
    %134 = vmatpush.msra.mxu0 %v101
    %135 = vmatpush.msra.mxu0 %v100
    %136 = vmatmul.f32.gmra.mxu0 %v99
    %v137 = vpop.f32.mrf.mxu0
    %v138 = vadd.f32 %v118, %v137
    %139 = vdwg.mxu0
    %140 = vst [vmem:[#allocation8] sm:$0xff] %v138
    // Predicated region
    $region34: #{tpu_custom_call.1} parent=1 // pred_check
      _
    $region35: #{tpu_custom_call.1} parent=1 // pred_check_branch
      %142 = sbr.rel (0) target = $region37
    $region36: #{tpu_custom_call.1} parent=1 // pred_region
      %144 = vsyncadd [#allocation4], 0
      %s146 = sshll.u32 [#allocation8], 4
      %s147 = int_to_ptr.vmem [resolvable:$true] %s146
      %s148 = sshll.u32 %s5, 4
      %s149 = int_to_ptr.hbm [resolvable:$true] %s148
      %151 = dma.vmem_to_hbm [thread:$0]  %s147, 128, %s149, [#allocation4]
    $region37: #{tpu_custom_call.1} parent=1 // pred_fallthru
      _
    // Predicated region
    $region38: #{tpu_custom_call.1} parent=1 // pred_check
      _
    $region39: #{tpu_custom_call.1} parent=1 // pred_check_branch
      %153 = sbr.rel (0) target = $region41
    $region40: #{tpu_custom_call.1} parent=1 // pred_region
      %155 = dma.done [#allocation4], 128
    $region41: #{tpu_custom_call.1} parent=1 // pred_fallthru
      _
    %156 = vsyncpa [#allocation3], 1
    %157 = vsyncpa [#allocation6], 1
    %158 = vsyncpa [#allocation4], 1

</llo_original>
